<compile_context>
chip_gen: v7x
topology: tpu7x:2x2x1
jax: 0.10.0
libtpu: 0.0.40
codegen_flags: <defaults>
</compile_context>

<pallas_src>
import functools

import jax
import jax.numpy as jnp
from jax.experimental import pallas as pl
from jax.experimental.pallas import tpu as pltpu


def _score_pooling_kernel(x_ref, w_ref, b_ref, o_ref, *, pooling_mode):
    # Upcast after the VMEM load: DMA moves native-dtype bytes, cast is free-ish
    # on the VPU.
    x = x_ref[...].astype(jnp.float32)                 # [TB, N, D]

    # Instance pooling over the bag (N) axis — specialized at trace time.
    if pooling_mode == "max":
        pooled = jnp.max(x, axis=1)                    # [TB, D]
    elif pooling_mode == "lse":
        m = jnp.max(x, axis=1)                         # stable log-mean-exp
        pooled = m + jnp.log(jnp.mean(jnp.exp(x - m[:, None, :]), axis=1))
    elif pooling_mode == "ave":
        pooled = jnp.mean(x, axis=1)
    else:
        raise ValueError(f"unknown pooling_mode: {pooling_mode}")

    # fc: pooled @ W^T + b.  W is passed pre-transposed as [D, out_dim]; the
    # matmul is MXU work fully hidden under the x DMA (don't micro-tune it).
    z = jnp.dot(pooled, w_ref[...], preferred_element_type=jnp.float32)
    z = z + b_ref[...]                                 # [TB, out_dim]
    o_ref[...] = jax.nn.sigmoid(z).astype(o_ref.dtype)


def _round_up(v, m):
    return int(pl.cdiv(v, m)) * m


def _pick_bag_block(B, N, D, itemsize):
    """Choose the number of bags per grid step.

    * ~2 MiB of x per step (double-buffered -> ~4 MiB VMEM): big enough to be
      near the HBM roofline, small enough for the 32 MiB scoped default on
      every generation (incl. v7x's 64 MiB physical VMEM).
    * At least 2 grid steps when B > 8 so the "parallel" axis can shard
      across v7x's two TensorCores.
    """
    per_bag = max(N * D * itemsize, 1)
    cap = max(8, (2 * 1024 * 1024 // per_bag) // 8 * 8)
    tb = min(cap, _round_up(pl.cdiv(B, 2), 8))
    return max(8, tb)


def score_pooling_forward(x, weight, bias, *, pooling_mode="max",
                          bag_block=None):
    """Batched Score_pooling forward.

    x:      [B, N, D] batch of bags, or [N, D] single bag (module signature)
    weight: [out_dim, D]  (torch nn.Linear layout)
    bias:   [out_dim]
    returns [B, out_dim]  (or [1, out_dim] for a single bag)
    """
    single = x.ndim == 2
    if single:
        x = x[None]
    B, N, D = x.shape
    out_dim, d2 = weight.shape
    assert d2 == D and bias.shape == (out_dim,)

    itemsize = jnp.dtype(x.dtype).itemsize
    if bag_block is None:
        TB = _pick_bag_block(B, N, D, itemsize)
    else:
        TB = max(8, _round_up(bag_block, 8))
    B_pad = _round_up(B, TB)

    # Only the bag axis is ever padded (and only when B % TB != 0); no copy,
    # no dtype upcast, no feature/lane padding of x on the hot path.
    if B_pad != B:
        x = jnp.pad(x, ((0, B_pad - B), (0, 0), (0, 0)))

    w_t = weight.astype(jnp.float32).T                 # [D, out_dim], tiny
    b_2d = bias.astype(jnp.float32)[None, :]           # [1, out_dim], tiny

    kernel = functools.partial(_score_pooling_kernel, pooling_mode=pooling_mode)

    out = pl.pallas_call(
        kernel,
        out_shape=jax.ShapeDtypeStruct((B_pad, out_dim), jnp.float32),
        grid=(B_pad // TB,),
        in_specs=[
            # N and D equal the full array dims -> (8,128) rule satisfied
            # without padding x.
            pl.BlockSpec((TB, N, D), lambda i: (i, 0, 0)),     # bag block
            pl.BlockSpec((D, out_dim), lambda i: (0, 0)),      # W^T (shared)
            pl.BlockSpec((1, out_dim), lambda i: (0, 0)),      # bias (shared)
        ],
        out_specs=pl.BlockSpec((TB, out_dim), lambda i: (i, 0)),
        compiler_params=pltpu.CompilerParams(
            dimension_semantics=("parallel",)),
    )(x, w_t, b_2d)

    return out[:B]


def _reference(x, weight, bias, pooling_mode):
    if x.ndim == 2:
        x = x[None]
    if pooling_mode == "max":
        pooled = jnp.max(x, axis=1)
    elif pooling_mode == "lse":
        pooled = jnp.log(jnp.mean(jnp.exp(x), axis=1))
    else:
        pooled = jnp.mean(x, axis=1)
    return jax.nn.sigmoid(pooled @ weight.T + bias[None, :])


if __name__ == "__main__":
    # Module defaults: input_dim=64, output_dim=1, bags of 8 instances;
    # a batch of 16 bags exercises the batched (2-grid-step) path.
    B, N, INPUT_DIM, OUTPUT_DIM = 16, 8, 64, 1

    key = jax.random.PRNGKey(0)
    kx, kw, kb = jax.random.split(key, 3)

    x = jax.random.normal(kx, (B, N, INPUT_DIM), dtype=jnp.float32)
    weight = jax.random.normal(kw, (OUTPUT_DIM, INPUT_DIM),
                               dtype=jnp.float32) * 0.1
    bias = jax.random.normal(kb, (OUTPUT_DIM,), dtype=jnp.float32) * 0.1

    # Batched forward, all three pooling modes.
    for mode in ("max", "lse", "ave"):
        out = jax.block_until_ready(
            score_pooling_forward(x, weight, bias, pooling_mode=mode))
        ref = _reference(x, weight, bias, mode)
        assert out.shape == (B, OUTPUT_DIM), out.shape
        assert jnp.allclose(out, ref, atol=1e-5, rtol=1e-5), (mode, out, ref)

    # Original single-bag module signature: [N, D] -> [1, out_dim].
    out1 = jax.block_until_ready(
        score_pooling_forward(x[0], weight, bias, pooling_mode="max"))
    assert out1.shape == (1, OUTPUT_DIM)
    assert jnp.allclose(out1, _reference(x[0], weight, bias, "max"),
                        atol=1e-5, rtol=1e-5)

    # Explicit bag_block override (single grid step).
    out16 = jax.block_until_ready(
        score_pooling_forward(x, weight, bias, pooling_mode="max",
                              bag_block=16))
    assert jnp.allclose(out16, _reference(x, weight, bias, "max"),
                        atol=1e-5, rtol=1e-5)

    print("KERNEL_OK")
</pallas_src>

<mosaic_0001>
module attributes {stable_mosaic.version = 11 : i64} {
  func.func @_score_pooling_kernel(%arg0: i32, %arg1: memref<8x8x64xf32, #tpu.memory_space<vmem>>, %arg2: memref<64x1xf32, #tpu.memory_space<vmem>>, %arg3: memref<1x1xf32, #tpu.memory_space<vmem>>, %arg4: memref<8x1xf32, #tpu.memory_space<vmem>>) attributes {dimension_semantics = [#tpu.dimension_semantics<parallel>], iteration_bounds = array<i64: 2>, scalar_prefetch = 0 : i64, scratch_operands = 0 : i64, tpu.core_type = #tpu.core_type<tc>, window_params = [{transform_indices = @transform_0, window_bounds = array<i64: 8, 8, 64>}, {pipeline_mode = #tpu.pipeline_mode<synchronous>, transform_indices = @transform_1, window_bounds = array<i64: 64, 1>}, {pipeline_mode = #tpu.pipeline_mode<synchronous>, transform_indices = @transform_2, window_bounds = array<i64: 1, 1>}, {transform_indices = @transform_3, window_bounds = array<i64: 8, 1>}]} {
    %c0 = arith.constant 0 : index
    %c0_0 = arith.constant 0 : index
    %c0_1 = arith.constant 0 : index
    %0 = vector.load %arg1[%c0, %c0_0, %c0_1] : memref<8x8x64xf32, #tpu.memory_space<vmem>>, vector<8x8x64xf32>
    %cst = arith.constant dense<0xFF800000> : vector<8x64xf32>
    %1 = vector.multi_reduction <maximumf>, %0, %cst [1] : vector<8x8x64xf32> to vector<8x64xf32>
    %c0_2 = arith.constant 0 : index
    %c0_3 = arith.constant 0 : index
    %2 = vector.load %arg2[%c0_2, %c0_3] : memref<64x1xf32, #tpu.memory_space<vmem>>, vector<64x1xf32>
    %cst_4 = arith.constant dense<0.000000e+00> : vector<8x1xf32>
    %3 = tpu.matmul %1, %2, %cst_4 {dimension_numbers = #tpu.dot_dimension_numbers<[1], [0], [0], [1], [0, 0, 1, 1], [], []>} : vector<8x64xf32>, vector<64x1xf32>, vector<8x1xf32> -> vector<8x1xf32>
    %c0_5 = arith.constant 0 : index
    %c0_6 = arith.constant 0 : index
    %4 = vector.load %arg3[%c0_5, %c0_6] : memref<1x1xf32, #tpu.memory_space<vmem>>, vector<1x1xf32>
    %5 = vector.broadcast %4 : vector<1x1xf32> to vector<8x1xf32>
    %6 = arith.addf %3, %5 : vector<8x1xf32>
    %7 = arith.negf %6 : vector<8x1xf32>
    %8 = math.exp %7 : vector<8x1xf32>
    %cst_7 = arith.constant 1.000000e+00 : f32
    %9 = vector.broadcast %cst_7 : f32 to vector<8x1xf32>
    %10 = arith.addf %9, %8 : vector<8x1xf32>
    %11 = arith.divf %9, %10 : vector<8x1xf32>
    %c0_8 = arith.constant 0 : index
    %c0_9 = arith.constant 0 : index
    %12 = vector.load %arg4[%c0_8, %c0_9] : memref<8x1xf32, #tpu.memory_space<vmem>>, vector<8x1xf32>
    tpu.vector_store %arg4[%c0_8, %c0_9], %11 {strides = array<i32>} : memref<8x1xf32, #tpu.memory_space<vmem>>, vector<8x1xf32>,
    return
  }
  func.func @transform_0(%arg0: i32) -> (i32, i32, i32) {
    %c0_i32 = arith.constant 0 : i32
    %c0_i32_0 = arith.constant 0 : i32
    %c0_i32_1 = arith.constant 0 : i32
    return %arg0, %c0_i32, %c0_i32_0 : i32, i32, i32
  }
  func.func @transform_1(%arg0: i32) -> (i32, i32) {
    %c0_i32 = arith.constant 0 : i32
    %c0_i32_0 = arith.constant 0 : i32
    %c0_i32_1 = arith.constant 0 : i32
    return %c0_i32, %c0_i32_0 : i32, i32
  }
  func.func @transform_2(%arg0: i32) -> (i32, i32) {
    %c0_i32 = arith.constant 0 : i32
    %c0_i32_0 = arith.constant 0 : i32
    %c0_i32_1 = arith.constant 0 : i32
    return %c0_i32, %c0_i32_0 : i32, i32
  }
  func.func @transform_3(%arg0: i32) -> (i32, i32) {
    %c0_i32 = arith.constant 0 : i32
    %c0_i32_0 = arith.constant 0 : i32
    return %arg0, %c0_i32 : i32, i32
  }
}

</mosaic_0001>

<llo_original>
// kernel: tpu_custom_call.1
$region0: #{tpu_custom_call.1}
  #allocation0 [shape = 'u32[]', space=smem, size = 0x4, offset = 0x4, fixed_abs, tag = 'smem constant byte address 0x4 - core index']
  #allocation1 [shape = 'u32[144,128]{1,0:T(1,128)}', space=vmem, size = 0x12000, scoped, tag = 'internal scratch']
  #allocation2 [shape = 'f32[1,1]{1,0:T(1,128)S(1)}', space=vmem, size = 0x200, scoped, tag = 'scoped memory for tpu_custom_call.1']
  %s0 = inlined_call_operand.hbm [shape: f32[16,8,64], index: 0, kind: input, shape index: {}]
  %s1 = inlined_call_operand.vmem [shape: f32[64,1], index: 1, kind: input, shape index: {}]
  %s2 = inlined_call_operand.<no memory space> [shape: f32[1,1], index: 2, kind: input, shape index: {}]
  %s3 = inlined_call_operand.vmem [shape: f32[16,1], index: 3, kind: output, shape index: {}]
  %s4 = sld [smem:[#allocation0]]
  $region49: #{tpu_custom_call.1} parent=0
    _
  %s6 = ssub.s32 1, %s4
  %s7 = scalar_select 0, %s6, %s4
  %v8 = vstv %s2
  %9 = vst [vmem:[#allocation2] sm:$0x1] %v8
  $region1: #{tpu_custom_call.1} parent=0
    #allocation3 [shape = 'u8[65536]{0}', space=vmem, size = 0x10000, scoped, tag = 'input window, operand 0']
    #allocation4 [shape = 's32[2]{0}', space=sflag, size = 0x8, scoped, tag = 'scoped memory for tpu_custom_call.1']
    %10 = vsyncpa [#allocation4], 0
    %s11 = scalar_lea.sflag [#allocation4], 1
    %12 = vsyncpa %s11, 0
    loop: start=0, step=1, limit=4
    $region2: #{tpu_custom_call.1} parent=1 // loop_pre_header
      _
    $region3: #{tpu_custom_call.1} parent=1 // loop_header
      %s14 = sphi 0, %s18
      %p15 = scmp.ge.s32.totalorder %s14, 4
      %s24 = sphi 0, %s26
      %s27 = sphi 0, %s24
      %s28 = sphi 0, %s27
      %s44 = sphi 0, %s28
      %s48 = sphi 0, %s48
      %s50 = sphi 0, %s48
      %s51 = sphi 0, %s50
      %s65 = sphi 0, %s51
      %s69 = sphi 0, %s69
      %s71 = sphi 0, %s69
      %s72 = sphi 0, %s71
      %s86 = sphi 0, %s72
      %s92 = sphi 0, %s94
      %s95 = sphi 0, %s92
      %s96 = sphi 0, %s95
      %s112 = sphi 0, %s96
    $region4: #{tpu_custom_call.1} parent=1 // loop_header_branch
      %17 = sbr.rel (%p15) target = $region8
    $region5: #{tpu_custom_call.1} parent=1 // loop_body
      %s19 = ssub.s32 %s14, 1
      %s20 = ssub.s32 %s14, 2
      %s21 = sadd.s32 %s14, 1
      %s22 = ssub.s32 %s14, %s21
      %p23 = scmp.eq.s32.totalorder %s22, 0
      %s25 = sadd.s32 %s24, 1
      %s26 = scalar_select %p23, %s24, %s25
      %p29 = pneg %p23
      %p30 = scmp.eq.s32.totalorder %s14, 1
      %p31 = por %p29, %p30
      %p32 = scmp.ne.s32.totalorder %s24, %s27
      %p33 = scmp.eq.s32.totalorder %s14, 0
      %p34 = por %p32, %p33
      %p35 = scmp.ne.s32.totalorder %s24, %s27
      %p36 = scmp.eq.s32.totalorder %s19, 1
      %p37 = por %p35, %p36
      %p38 = scmp.ne.s32.totalorder %s27, %s28
      %p39 = scmp.eq.s32.totalorder %s19, 0
      %p40 = por %p38, %p39
      %p41 = scmp.ne.s32.totalorder %s27, %s28
      %p42 = scmp.eq.s32.totalorder %s20, 1
      %p43 = por %p41, %p42
      %p45 = scmp.ne.s32.totalorder %s28, %s44
      %p46 = scmp.eq.s32.totalorder %s20, 0
      %p47 = por %p45, %p46
      %s49 = sadd.s32 %s48, 1
      %p52 = scmp.eq.s32.totalorder %s14, 1
      %p53 = scmp.ne.s32.totalorder %s48, %s50
      %p54 = scmp.eq.s32.totalorder %s14, 0
      %p55 = por %p53, %p54
      %p56 = scmp.ne.s32.totalorder %s48, %s50
      %p57 = scmp.eq.s32.totalorder %s19, 1
      %p58 = por %p56, %p57
      %p59 = scmp.ne.s32.totalorder %s50, %s51
      %p60 = scmp.eq.s32.totalorder %s19, 0
      %p61 = por %p59, %p60
      %p62 = scmp.ne.s32.totalorder %s50, %s51
      %p63 = scmp.eq.s32.totalorder %s20, 1
      %p64 = por %p62, %p63
      %p66 = scmp.ne.s32.totalorder %s51, %s65
      %p67 = scmp.eq.s32.totalorder %s20, 0
      %p68 = por %p66, %p67
      %s70 = sadd.s32 %s69, 1
      %p73 = scmp.eq.s32.totalorder %s14, 1
      %p74 = scmp.ne.s32.totalorder %s69, %s71
      %p75 = scmp.eq.s32.totalorder %s14, 0
      %p76 = por %p74, %p75
      %p77 = scmp.ne.s32.totalorder %s69, %s71
      %p78 = scmp.eq.s32.totalorder %s19, 1
      %p79 = por %p77, %p78
      %p80 = scmp.ne.s32.totalorder %s71, %s72
      %p81 = scmp.eq.s32.totalorder %s19, 0
      %p82 = por %p80, %p81
      %p83 = scmp.ne.s32.totalorder %s71, %s72
      %p84 = scmp.eq.s32.totalorder %s20, 1
      %p85 = por %p83, %p84
      %p87 = scmp.ne.s32.totalorder %s72, %s86
      %p88 = scmp.eq.s32.totalorder %s20, 0
      %p89 = por %p87, %p88
      %s90 = ssub.s32 %s14, %s21
      %p91 = scmp.eq.s32.totalorder %s90, 0
      %s93 = sadd.s32 %s92, 1
      %s94 = scalar_select %p91, %s92, %s93
      %p97 = pneg %p91
      %p98 = scmp.eq.s32.totalorder %s14, 1
      %p99 = por %p97, %p98
      %p100 = scmp.ne.s32.totalorder %s92, %s95
      %p101 = scmp.eq.s32.totalorder %s14, 0
      %p102 = por %p100, %p101
      %p103 = scmp.ne.s32.totalorder %s92, %s95
      %p104 = scmp.eq.s32.totalorder %s19, 1
      %p105 = por %p103, %p104
      %p106 = scmp.ne.s32.totalorder %s95, %s96
      %p107 = scmp.eq.s32.totalorder %s19, 0
      %p108 = por %p106, %p107
      %p109 = scmp.ne.s32.totalorder %s95, %s96
      %p110 = scmp.eq.s32.totalorder %s20, 1
      %p111 = por %p109, %p110
      %p113 = scmp.ne.s32.totalorder %s96, %s112
      %p114 = scmp.eq.s32.totalorder %s20, 0
      %p115 = por %p113, %p114
      %p116 = scmp.le.s32.totalorder 1, %s14
      %p117 = scmp.lt.s32.totalorder %s14, 3
      %p118 = pnand %p116, %p117
      %p119 = pneg %p118
      // Predicated region
      $region9: #{tpu_custom_call.1} parent=5 // pred_check
        _
      $region10: #{tpu_custom_call.1} parent=5 // pred_check_branch
        %121 = sbr.rel (%p118) target = $region12
      $region11: #{tpu_custom_call.1} parent=5 // pred_region
        %s122 = ssub.s32 %s14, 1
        // Predicated region
        $region13: #{tpu_custom_call.1} parent=11 // pred_check
          %p123 = pneg %p61
        $region14: #{tpu_custom_call.1} parent=11 // pred_check_branch
          %125 = sbr.rel (%p123) target = $region16
        $region15: #{tpu_custom_call.1} parent=11 // pred_region
          _
        $region16: #{tpu_custom_call.1} parent=11 // pred_fallthru
          _
        // Predicated region
        $region17: #{tpu_custom_call.1} parent=11 // pred_check
          %p126 = pneg %p82
        $region18: #{tpu_custom_call.1} parent=11 // pred_check_branch
          %128 = sbr.rel (%p126) target = $region20
        $region19: #{tpu_custom_call.1} parent=11 // pred_region
          _
        $region20: #{tpu_custom_call.1} parent=11 // pred_fallthru
          _
      $region12: #{tpu_custom_call.1} parent=5 // pred_fallthru
        _
      %p129 = scmp.lt.s32.totalorder %s14, 2
      // Predicated region
      $region21: #{tpu_custom_call.1} parent=5 // pred_check
        %p130 = pneg %p129
      $region22: #{tpu_custom_call.1} parent=5 // pred_check_branch
        %132 = sbr.rel (%p130) target = $region24
      $region23: #{tpu_custom_call.1} parent=5 // pred_region
        // Predicated region
        $region25: #{tpu_custom_call.1} parent=23 // pred_check
          %p133 = pneg %p34
        $region26: #{tpu_custom_call.1} parent=23 // pred_check_branch
          %135 = sbr.rel (%p133) target = $region28
        $region27: #{tpu_custom_call.1} parent=23 // pred_region
          %s136 = sand.u32 %s24, 1
          %s137 = scalar_lea.sflag [#allocation4], %s136
          %s138 = sand.u32 %s24, 1
          %s139 = smul.addr %s138, 64
          %s140 = scalar_lea.vmem [#allocation3], %s139
          %s141 = smul.u32 8, %s14
          %s143 = ssub.s32 1024, 1024
          %144 = vsyncadd %s137, %s143
          %s145 = smul.addr %s141, 128
          %s146 = scalar_lea.hbm %s0, %s145
          %s147 = sshll.u32 %s140, 4
          %s148 = int_to_ptr.vmem [resolvable:$true] %s147
          %153 = dma.hbm_to_vmem [thread:$0]  %s146, 1024, %s148, %s137, 128, 128, 8
        $region28: #{tpu_custom_call.1} parent=23 // pred_fallthru
          _
      $region24: #{tpu_custom_call.1} parent=5 // pred_fallthru
        _
      %p154 = scmp.le.s32.totalorder 1, %s14
      %p155 = scmp.lt.s32.totalorder %s14, 3
      %p156 = pnand %p154, %p155
      %p157 = pneg %p156
      // Predicated region
      $region29: #{tpu_custom_call.1} parent=5 // pred_check
        _
      $region30: #{tpu_custom_call.1} parent=5 // pred_check_branch
        %159 = sbr.rel (%p156) target = $region32
      $region31: #{tpu_custom_call.1} parent=5 // pred_region
        %s160 = ssub.s32 %s14, 1
        %s161 = sand.u32 %s27, 1
        %s162 = scalar_lea.sflag [#allocation4], %s161
        %s163 = sand.u32 %s27, 1
        %s164 = smul.addr %s163, 64
        %s165 = scalar_lea.vmem [#allocation3], %s164
        // Predicated region
        $region33: #{tpu_custom_call.1} parent=31 // pred_check
          %p166 = pneg %p40
        $region34: #{tpu_custom_call.1} parent=31 // pred_check_branch
          %168 = sbr.rel (%p166) target = $region36
        $region35: #{tpu_custom_call.1} parent=31 // pred_region
          %169 = dma.done %s162, 1024
        $region36: #{tpu_custom_call.1} parent=31 // pred_fallthru
          _
        %s170 = sand.u32 %s27, 1
        %s171 = scalar_lea.sflag [#allocation4], %s170
        %s172 = sand.u32 %s27, 1
        %s173 = smul.addr %s172, 64
        %s174 = scalar_lea.vmem [#allocation3], %s173
        %p175 = pneg %p40
        %p176 = pneg %p37
        %p177 = pneg %p61
        %p178 = pneg %p58
        %p179 = pneg %p82
        %p180 = pneg %p79
        %p181 = pneg %p108
        %p182 = pneg %p105
        %p183 = scmp.lt.s32.totalorder %s19, 1
        %s184 = scalar_select %p183, %s19, 1
        %s185 = smul.addr %s184, 8
        %s186 = scalar_lea.vmem %s3, %s185
        %s187 = smul.u32 8, %s19
        %p188 = scmp.lt.s32.totalorder %s19, 1
        %s189 = scalar_select %p188, %s19, 1
        %s190 = smul.addr %s189, 8
        %s191 = scalar_lea.vmem %s3, %s190
        %v192 = vld [vmem:[%s165] sm:$0xff]
        %v193 = vld [vmem:[%s165 + $0x8] sm:$0xff]
        %v194 = vld [vmem:[%s165 + $0x10] sm:$0xff]
        %v195 = vld [vmem:[%s165 + $0x18] sm:$0xff]
        %v196 = vld [vmem:[%s165 + $0x20] sm:$0xff]
        %v197 = vld [vmem:[%s165 + $0x28] sm:$0xff]
        %v198 = vld [vmem:[%s165 + $0x30] sm:$0xff]
        %v199 = vld [vmem:[%s165 + $0x38] sm:$0xff]
        %vm200 = vcmask 523264
        %v201 = vsel %vm200, %v192, -inf
        %v202 = vrot.slane %v201, 4
        %v203 = vmax.f32 %v201, %v202
        %v204 = vrot.slane %v203, 2
        %v205 = vmax.f32 %v203, %v204
        %v206 = vrot.slane %v205, 1
        %v207 = vmax.f32 %v205, %v206
        %v208 = vsel %vm200, %v193, -inf
        %v209 = vrot.slane %v208, 4
        %v210 = vmax.f32 %v208, %v209
        %v211 = vrot.slane %v210, 2
        %v212 = vmax.f32 %v210, %v211
        %v213 = vrot.slane %v212, 1
        %v214 = vmax.f32 %v212, %v213
        %v215 = vsel %vm200, %v194, -inf
        %v216 = vrot.slane %v215, 4
        %v217 = vmax.f32 %v215, %v216
        %v218 = vrot.slane %v217, 2
        %v219 = vmax.f32 %v217, %v218
        %v220 = vrot.slane %v219, 1
        %v221 = vmax.f32 %v219, %v220
        %v222 = vsel %vm200, %v195, -inf
        %v223 = vrot.slane %v222, 4
        %v224 = vmax.f32 %v222, %v223
        %v225 = vrot.slane %v224, 2
        %v226 = vmax.f32 %v224, %v225
        %v227 = vrot.slane %v226, 1
        %v228 = vmax.f32 %v226, %v227
        %v229 = vsel %vm200, %v196, -inf
        %v230 = vrot.slane %v229, 4
        %v231 = vmax.f32 %v229, %v230
        %v232 = vrot.slane %v231, 2
        %v233 = vmax.f32 %v231, %v232
        %v234 = vrot.slane %v233, 1
        %v235 = vmax.f32 %v233, %v234
        %v236 = vsel %vm200, %v197, -inf
        %v237 = vrot.slane %v236, 4
        %v238 = vmax.f32 %v236, %v237
        %v239 = vrot.slane %v238, 2
        %v240 = vmax.f32 %v238, %v239
        %v241 = vrot.slane %v240, 1
        %v242 = vmax.f32 %v240, %v241
        %v243 = vsel %vm200, %v198, -inf
        %v244 = vrot.slane %v243, 4
        %v245 = vmax.f32 %v243, %v244
        %v246 = vrot.slane %v245, 2
        %v247 = vmax.f32 %v245, %v246
        %v248 = vrot.slane %v247, 1
        %v249 = vmax.f32 %v247, %v248
        %v250 = vsel %vm200, %v199, -inf
        %v251 = vrot.slane %v250, 4
        %v252 = vmax.f32 %v250, %v251
        %v253 = vrot.slane %v252, 2
        %v254 = vmax.f32 %v252, %v253
        %v255 = vrot.slane %v254, 1
        %v256 = vmax.f32 %v254, %v255
        %v257 = vld [vmem:[%s1] sm:$0xff]
        %v258 = vld [vmem:[%s1 + $0x8] sm:$0xff]
        %v259 = vld [vmem:[%s1 + $0x10] sm:$0xff]
        %v260 = vld [vmem:[%s1 + $0x18] sm:$0xff]
        %v261 = vld [vmem:[%s1 + $0x20] sm:$0xff]
        %v262 = vld [vmem:[%s1 + $0x28] sm:$0xff]
        %v263 = vld [vmem:[%s1 + $0x30] sm:$0xff]
        %v264 = vld [vmem:[%s1 + $0x38] sm:$0xff]
        %v265 = vld [vmem:[#allocation2] sm:$0x1]
        %v267 = vlaneseq
        %v268 = vshrl.u32 %v267, 7
        %v269 = vsub.s32 0, %v268
        %v270 = vrot.slane %v265, %v269
        %vm280 = vcmask 1041409
        %v281 = vsel %vm280, %v214, %v207
        %vm282 = vcmask 1042434
        %v283 = vsel %vm282, %v221, %v281
        %vm284 = vcmask 1043459
        %v285 = vsel %vm284, %v228, %v283
        %vm286 = vcmask 1044484
        %v287 = vsel %vm286, %v235, %v285
        %vm288 = vcmask 1045509
        %v289 = vsel %vm288, %v242, %v287
        %vm290 = vcmask 1046534
        %v291 = vsel %vm290, %v249, %v289
        %vm292 = vcmask 1047559
        %v293 = vsel %vm292, %v256, %v291
        %v294 = vsel %vm200, %v293, 0
        %296 = vmatprep.subr.mxu0 0.0
        %297 = vmatpush1.msra.mxu0 %v257
        %298 = vmatprep.subr.mxu0 0.0
        %299 = vmatpush1.msra.mxu0 %v258
        %300 = vmatprep.subr.mxu0 0.0
        %301 = vmatpush1.msra.mxu0 %v259
        %302 = vmatprep.subr.mxu0 0.0
        %303 = vmatpush1.msra.mxu0 %v260
        %304 = vmatprep.subr.mxu0 0.0
        %305 = vmatpush1.msra.mxu0 %v261
        %306 = vmatprep.subr.mxu0 0.0
        %307 = vmatpush1.msra.mxu0 %v262
        %308 = vmatprep.subr.mxu0 0.0
        %309 = vmatpush1.msra.mxu0 %v263
        %310 = vmatprep.subr.mxu0 0.0
        %311 = vmatpush1.msra.mxu0 %v264
        %312 = vmatprep.subr.mxu0 0.0
        %313 = vmatpush1.msra.mxu0 0.0
        %314 = vmatprep.subr.mxu0 0.0
        %315 = vmatpush1.msra.mxu0 0.0
        %316 = vmatprep.subr.mxu0 0.0
        %317 = vmatpush1.msra.mxu0 0.0
        %318 = vmatprep.subr.mxu0 0.0
        %319 = vmatpush1.msra.mxu0 0.0
        %320 = vmatprep.subr.mxu0 0.0
        %321 = vmatpush1.msra.mxu0 0.0
        %322 = vmatprep.subr.mxu0 0.0
        %323 = vmatpush1.msra.mxu0 0.0
        %324 = vmatprep.subr.mxu0 0.0
        %325 = vmatpush1.msra.mxu0 0.0
        %326 = vmatprep.subr.mxu0 0.0
        %327 = vmatpush1.msra.mxu0 0.0
        %328 = vmatprep.subr.mxu0 0.0
        %329 = vmatpush1.msra.mxu0 0.0
        %330 = vmatprep.subr.mxu0 0.0
        %331 = vmatpush1.msra.mxu0 0.0
        %332 = vmatprep.subr.mxu0 0.0
        %333 = vmatpush1.msra.mxu0 0.0
        %334 = vmatprep.subr.mxu0 0.0
        %335 = vmatpush1.msra.mxu0 0.0
        %336 = vmatprep.subr.mxu0 0.0
        %337 = vmatpush1.msra.mxu0 0.0
        %338 = vmatprep.subr.mxu0 0.0
        %339 = vmatpush1.msra.mxu0 0.0
        %340 = vmatprep.subr.mxu0 0.0
        %341 = vmatpush1.msra.mxu0 0.0
        %342 = vmatprep.subr.mxu0 0.0
        %343 = vmatpush1.msra.mxu0 0.0
        %344 = vmatprep.subr.mxu0 0.0
        %345 = vmatpush1.msra.mxu0 0.0
        %346 = vmatprep.subr.mxu0 0.0
        %347 = vmatpush1.msra.mxu0 0.0
        %348 = vmatprep.subr.mxu0 0.0
        %349 = vmatpush1.msra.mxu0 0.0
        %350 = vmatprep.subr.mxu0 0.0
        %351 = vmatpush1.msra.mxu0 0.0
        %352 = vmatprep.subr.mxu0 0.0
        %353 = vmatpush1.msra.mxu0 0.0
        %354 = vmatprep.subr.mxu0 0.0
        %355 = vmatpush1.msra.mxu0 0.0
        %356 = vmatprep.subr.mxu0 0.0
        %357 = vmatpush1.msra.mxu0 0.0
        %358 = vmatprep.subr.mxu0 0.0
        %359 = vmatpush1.msra.mxu0 0.0
        %360 = vmatprep.mubr.f32.mxu0 0.0
        %361 = vmatmul.mubr.f32.gmra.mrb[0].mxu0 %v294
        %v362 = vpop.f32.mrb[0].mxu0
        %v363 = vadd.f32 %v270, %v362
        %v364 = vpop.f32.mrb[0].mxu0
        %365 = vdwg.mxu0
        %v366 = vxor.u32 %v363, 2147483648
        %v367 = vmul.f32 %v366, 1.442695
        %v368 = vpow.pop %v367
        %v369 = vadd.f32 %v368, 1.0
        %v370 = vrcp.pop %v369
        %v371 = vmul.f32 1.0, %v370
        %vm372 = vcmask 7168
        %373 = vst.msk [vmem:[%s191] sm:$0xff] %vm372, %v371
        %p374 = scmp.lt.s32.totalorder %s19, 1
        %s375 = scalar_select %p374, %s19, 1
        %s376 = smul.addr %s375, 8
        %s377 = scalar_lea.vmem %s3, %s376
        // Predicated region
        $region37: #{tpu_custom_call.1} parent=31 // pred_check
          %p378 = pneg %p105
        $region38: #{tpu_custom_call.1} parent=31 // pred_check_branch
          %380 = sbr.rel (%p378) target = $region40
        $region39: #{tpu_custom_call.1} parent=31 // pred_region
          _
        $region40: #{tpu_custom_call.1} parent=31 // pred_fallthru
          _
      $region32: #{tpu_custom_call.1} parent=5 // pred_fallthru
        _
      %p381 = scmp.le.s32.totalorder 2, %s14
      // Predicated region
      $region41: #{tpu_custom_call.1} parent=5 // pred_check
        %p382 = pneg %p381
      $region42: #{tpu_custom_call.1} parent=5 // pred_check_branch
        %384 = sbr.rel (%p382) target = $region44
      $region43: #{tpu_custom_call.1} parent=5 // pred_region
        %s385 = ssub.s32 %s14, 2
        // Predicated region
        $region45: #{tpu_custom_call.1} parent=43 // pred_check
          %p386 = pneg %p111
        $region46: #{tpu_custom_call.1} parent=43 // pred_check_branch
          %388 = sbr.rel (%p386) target = $region48
        $region47: #{tpu_custom_call.1} parent=43 // pred_region
          %p389 = scmp.lt.s32.totalorder %s20, 1
          %s390 = scalar_select %p389, %s20, 1
          %s391 = smul.addr %s390, 8
          %s392 = scalar_lea.vmem %s3, %s391
        $region48: #{tpu_custom_call.1} parent=43 // pred_fallthru
          _
      $region44: #{tpu_custom_call.1} parent=5 // pred_fallthru
        _
    $region6: #{tpu_custom_call.1} parent=1 // loop_footer
      %s18 = sadd.s32 1, %s14
    $region7: #{tpu_custom_call.1} parent=1 // loop_footer_branch
      %13 = sbr.rel target = $region3
    $region8: #{tpu_custom_call.1} parent=1 // loop_exit
      _
    %393 = vsyncpa [#allocation4], 1
    %s394 = scalar_lea.sflag [#allocation4], 1
    %395 = vsyncpa %s394, 1

</llo_original>
